<compile_context>
chip_gen: v6e
topology: v6e:2x2x1
jax: 0.10.0
libtpu: 0.0.40
codegen_flags: <defaults>
</compile_context>

<pallas_src>
import functools

import jax
import jax.numpy as jnp
from jax.experimental import pallas as pl
from jax.experimental.pallas import tpu as pltpu


# ---------------------------------------------------------------------------
# Tiling helpers
# ---------------------------------------------------------------------------
_MAX_TILE_HW = 1024 * 128  # 131072 lanes -> rgb tile = 3*131072*4B = 1.5 MB


def _round_up(x, m):
    return ((x + m - 1) // m) * m


def _choose_tile_hw(hw):
    # Tile is a multiple of 128; HW gets padded up to a multiple of the tile.
    return min(_MAX_TILE_HW, _round_up(hw, 128))


def _to_planar(rgb, mask, hwp):
    """rgb [T,H,W,3], mask [T,H,W] -> planar [T,3,HWp], [T,1,HWp] (zero pad)."""
    T, H, W, C = rgb.shape
    hw = H * W
    rgb_p = jnp.transpose(rgb, (0, 3, 1, 2)).reshape(T, C, hw)
    mask_p = mask.reshape(T, 1, hw)
    pad = hwp - hw
    if pad:
        rgb_p = jnp.pad(rgb_p, ((0, 0), (0, 0), (0, pad)))
        mask_p = jnp.pad(mask_p, ((0, 0), (0, 0), (0, pad)))
    return rgb_p, mask_p


# ---------------------------------------------------------------------------
# Kernel 1: in-place rgb compositing (prepare_for_fitting), lane-dense + tiled
# ---------------------------------------------------------------------------
def _composite_kernel(rgb_ref, mask_ref, out_ref):
    m = mask_ref[...]                                  # (1, 1, TILE)
    out_ref[...] = rgb_ref[...] * m + (1.0 - m)        # (1, 3, TILE)


@functools.partial(jax.jit, static_argnums=(2,), donate_argnums=(0,))
def composite_rgb_planar(rgb_planar, mask_planar, tile_hw):
    """rgb_planar [T,3,HWp], mask_planar [T,1,HWp] -> composited rgb [T,3,HWp]."""
    T, C, HWp = rgb_planar.shape
    grid = (T, HWp // tile_hw)
    return pl.pallas_call(
        _composite_kernel,
        out_shape=jax.ShapeDtypeStruct((T, C, HWp), rgb_planar.dtype),
        grid_spec=pltpu.PrefetchScalarGridSpec(
            num_scalar_prefetch=0,
            grid=grid,
            in_specs=[
                pl.BlockSpec((1, C, tile_hw), lambda t, h: (t, 0, h)),
                pl.BlockSpec((1, 1, tile_hw), lambda t, h: (t, 0, h)),
            ],
            out_specs=pl.BlockSpec((1, C, tile_hw), lambda t, h: (t, 0, h)),
        ),
        compiler_params=pltpu.CompilerParams(
            dimension_semantics=("parallel", "parallel")),
        input_output_aliases={0: 0},   # composite rgb in place (donated)
    )(rgb_planar, mask_planar)


# ---------------------------------------------------------------------------
# Kernel 2: forward() gather of rgb+mask at frame indices (scalar prefetch)
# ---------------------------------------------------------------------------
def _gather_kernel(idx_ref, rgb_ref, mask_ref, rgb_out_ref, mask_out_ref):
    # The gather itself is expressed by the data-dependent index_map (idx[i]);
    # the body just moves the selected lane-dense tiles.
    del idx_ref
    rgb_out_ref[...] = rgb_ref[...]
    mask_out_ref[...] = mask_ref[...]


@functools.partial(jax.jit, static_argnums=(3,))
def gather_rgb_mask(index, rgb_planar, mask_planar, tile_hw):
    """index [N] int32 (pre-clamped); rgb_planar [T,3,HWp]; mask_planar [T,1,HWp]."""
    T, C, HWp = rgb_planar.shape
    N = int(index.shape[0])
    grid = (N, HWp // tile_hw)

    def in_map(i, h, idx):
        return (idx[i], 0, h)

    def out_map(i, h, idx):
        return (i, 0, h)

    rgb_g, mask_g = pl.pallas_call(
        _gather_kernel,
        out_shape=(
            jax.ShapeDtypeStruct((N, C, HWp), rgb_planar.dtype),
            jax.ShapeDtypeStruct((N, 1, HWp), mask_planar.dtype),
        ),
        grid_spec=pltpu.PrefetchScalarGridSpec(
            num_scalar_prefetch=1,
            grid=grid,
            in_specs=[
                pl.BlockSpec((1, C, tile_hw), in_map),
                pl.BlockSpec((1, 1, tile_hw), in_map),
            ],
            out_specs=[
                pl.BlockSpec((1, C, tile_hw), out_map),
                pl.BlockSpec((1, 1, tile_hw), out_map),
            ],
        ),
        compiler_params=pltpu.CompilerParams(
            dimension_semantics=("parallel", "parallel")),
    )(index, rgb_planar, mask_planar)
    return rgb_g, mask_g


# ---------------------------------------------------------------------------
# JAX-side module mirroring RealDataOptimizablePoseProviderPose
# ---------------------------------------------------------------------------
class RealDataOptimizablePoseProviderPose:
    def __init__(self, rgb_list, mask_list, K_list, pose_list,
                 global_trans_list, betas):
        T, H, W, _ = rgb_list.shape
        self.T, self.H, self.W = T, H, W
        hw = H * W
        self.tile_hw = _choose_tile_hw(hw)
        self.HWp = _round_up(hw, self.tile_hw)

        # prepare_for_fitting: lane-dense planar layout + in-place composite.
        rgb_p, mask_p = _to_planar(rgb_list, mask_list, self.HWp)
        self._rgb_planar = composite_rgb_planar(rgb_p, mask_p, self.tile_hw)
        self._mask_planar = mask_p

        self.K_list = K_list
        self.betas = betas
        # "parameters"
        self.pose_base_list = pose_list[:, :1]          # [T, 1, 3]
        self.pose_rest_list = pose_list[:, 1:]          # [T, J-1, 3]
        self.global_trans_list = global_trans_list      # [T, 3]
        # buffers
        self.pose_list_original = pose_list
        self.global_trans_list_original = global_trans_list

    # Channels-last views for attribute fidelity with the PyTorch module.
    @property
    def rgb_list(self):
        T, H, W = self.T, self.H, self.W
        return jnp.transpose(
            self._rgb_planar[:, :, :H * W].reshape(T, 3, H, W), (0, 2, 3, 1))

    @property
    def mask_list(self):
        T, H, W = self.T, self.H, self.W
        return self._mask_planar[:, 0, :H * W].reshape(T, H, W)

    @property
    def pose_diff(self):
        pose = jnp.concatenate([self.pose_base_list, self.pose_rest_list], axis=1)
        return (pose - self.pose_list_original,
                self.global_trans_list - self.global_trans_list_original)

    def forward(self, index):
        index = jnp.asarray(index, jnp.int32)
        if index.ndim == 0:
            index = index[None]
        # Clamp before it drives the data-dependent index_map (no OOB blocks).
        safe_index = jnp.clip(index, 0, self.T - 1)

        rgb_g, mask_g = gather_rgb_mask(
            safe_index, self._rgb_planar, self._mask_planar, self.tile_hw)

        N = int(index.shape[0])
        H, W = self.H, self.W
        hw = H * W
        gt_rgb = jnp.transpose(
            rgb_g[:, :, :hw].reshape(N, 3, H, W), (0, 2, 3, 1))
        gt_mask = mask_g[:, 0, :hw].reshape(N, H, W)

        # Tiny per-frame tensors: plain XLA gather (no sub-128-lane DMAs).
        K = jnp.take(self.K_list, safe_index, axis=0)
        pose_base = jnp.take(self.pose_base_list, safe_index, axis=0)
        pose_rest = jnp.take(self.pose_rest_list, safe_index, axis=0)
        global_trans = jnp.take(self.global_trans_list, safe_index, axis=0)
        return gt_rgb, gt_mask, K, pose_base, pose_rest, global_trans, index


# ---------------------------------------------------------------------------
# Main: deterministic synthetic "dataset", run kernels, verify vs plain JAX
# ---------------------------------------------------------------------------
if __name__ == "__main__":
    key = jax.random.PRNGKey(0)
    T, H, W, J = 8, 16, 16, 24   # frames, image size, SMPL joints
    N = 4                        # batch of sampled frames

    k1, k2, k3, k4, k5, k6 = jax.random.split(key, 6)
    rgb_list = jax.random.uniform(k1, (T, H, W, 3), jnp.float32)
    mask_list = (jax.random.uniform(k2, (T, H, W), jnp.float32) > 0.5
                 ).astype(jnp.float32)
    K_list = jax.random.normal(k3, (T, 3, 3), jnp.float32)
    pose_list = 0.1 * jax.random.normal(k4, (T, J, 3), jnp.float32)
    global_trans_list = jax.random.normal(k5, (T, 3), jnp.float32)
    betas = 0.01 * jax.random.normal(k6, (10,), jnp.float32)

    provider = RealDataOptimizablePoseProviderPose(
        rgb_list, mask_list, K_list, pose_list, global_trans_list, betas)

    index = jnp.array([1, 5, 0, 3], dtype=jnp.int32)
    outs = provider.forward(index)
    outs = jax.block_until_ready(outs)
    gt_rgb, gt_mask, K, pose_base, pose_rest, global_trans, t = outs

    # Reference (plain JAX) check
    rgb_comp_ref = rgb_list * mask_list[..., None] + (1.0 - mask_list[..., None])
    assert jnp.allclose(gt_rgb, rgb_comp_ref[index], atol=1e-6)
    assert jnp.allclose(gt_mask, mask_list[index], atol=1e-6)
    assert jnp.allclose(K, K_list[index], atol=1e-6)
    assert jnp.allclose(pose_base, pose_list[index, :1], atol=1e-6)
    assert jnp.allclose(pose_rest, pose_list[index, 1:], atol=1e-6)
    assert jnp.allclose(global_trans, global_trans_list[index], atol=1e-6)
    assert jnp.array_equal(t, index)
    assert gt_rgb.shape == (N, H, W, 3) and gt_mask.shape == (N, H, W)
    assert K.shape == (N, 3, 3) and pose_base.shape == (N, 1, 3)
    assert pose_rest.shape == (N, J - 1, 3) and global_trans.shape == (N, 3)

    # Scalar-index path (mirrors index.dim() == 0 handling in the spec).
    outs1 = jax.block_until_ready(provider.forward(jnp.int32(2)))
    assert jnp.allclose(outs1[0][0], rgb_comp_ref[2], atol=1e-6)

    print("KERNEL_OK")
</pallas_src>

<mosaic_0001>
module attributes {stable_mosaic.version = 11 : i64} {
  func.func @_composite_kernel(%arg0: i32, %arg1: i32, %arg2: memref<1x3x256xf32, #tpu.memory_space<vmem>>, %arg3: memref<1x1x256xf32, #tpu.memory_space<vmem>>, %arg4: memref<1x3x256xf32, #tpu.memory_space<vmem>>) attributes {dimension_semantics = [#tpu.dimension_semantics<parallel>, #tpu.dimension_semantics<parallel>], iteration_bounds = array<i64: 8, 1>, scalar_prefetch = 0 : i64, scratch_operands = 0 : i64, tpu.core_type = #tpu.core_type<tc>, window_params = [{transform_indices = @transform_0, window_bounds = array<i64: 1, 3, 256>}, {transform_indices = @transform_1, window_bounds = array<i64: 1, 1, 256>}, {transform_indices = @transform_2, window_bounds = array<i64: 1, 3, 256>}]} {
    %c0 = arith.constant 0 : index
    %c0_0 = arith.constant 0 : index
    %c0_1 = arith.constant 0 : index
    %0 = vector.load %arg3[%c0, %c0_0, %c0_1] : memref<1x1x256xf32, #tpu.memory_space<vmem>>, vector<1x1x256xf32>
    %c0_2 = arith.constant 0 : index
    %c0_3 = arith.constant 0 : index
    %c0_4 = arith.constant 0 : index
    %1 = vector.load %arg2[%c0_2, %c0_3, %c0_4] : memref<1x3x256xf32, #tpu.memory_space<vmem>>, vector<1x3x256xf32>
    %2 = vector.broadcast %0 : vector<1x1x256xf32> to vector<1x3x256xf32>
    %3 = arith.mulf %1, %2 : vector<1x3x256xf32>
    %cst = arith.constant 1.000000e+00 : f32
    %4 = vector.broadcast %cst : f32 to vector<1x1x256xf32>
    %5 = arith.subf %4, %0 : vector<1x1x256xf32>
    %6 = vector.broadcast %5 : vector<1x1x256xf32> to vector<1x3x256xf32>
    %7 = arith.addf %3, %6 : vector<1x3x256xf32>
    %c0_5 = arith.constant 0 : index
    %c0_6 = arith.constant 0 : index
    %c0_7 = arith.constant 0 : index
    %8 = vector.load %arg4[%c0_5, %c0_6, %c0_7] : memref<1x3x256xf32, #tpu.memory_space<vmem>>, vector<1x3x256xf32>
    tpu.vector_store %arg4[%c0_5, %c0_6, %c0_7], %7 {strides = array<i32>} : memref<1x3x256xf32, #tpu.memory_space<vmem>>, vector<1x3x256xf32>,
    return
  }
  func.func @transform_0(%arg0: i32, %arg1: i32) -> (i32, i32, i32) {
    %c0_i32 = arith.constant 0 : i32
    %c0_i32_0 = arith.constant 0 : i32
    return %arg0, %c0_i32, %arg1 : i32, i32, i32
  }
  func.func @transform_1(%arg0: i32, %arg1: i32) -> (i32, i32, i32) {
    %c0_i32 = arith.constant 0 : i32
    %c0_i32_0 = arith.constant 0 : i32
    return %arg0, %c0_i32, %arg1 : i32, i32, i32
  }
  func.func @transform_2(%arg0: i32, %arg1: i32) -> (i32, i32, i32) {
    %c0_i32 = arith.constant 0 : i32
    %c0_i32_0 = arith.constant 0 : i32
    return %arg0, %c0_i32, %arg1 : i32, i32, i32
  }
}

</mosaic_0001>

<llo_original>
// kernel: composite_rgb_planar.1
$region0: #{composite_rgb_planar.1}
  #allocation0 [shape = 'u32[]', space=smem, size = 0x4, offset = 0x4, fixed_abs, tag = 'smem constant byte address 0x4 - core index']
  #allocation1 [shape = 'u32[144,128]{1,0:T(1,128)}', space=vmem, size = 0x12000, scoped, tag = 'internal scratch']
  %s0 = inlined_call_operand.vmem [shape: f32[8,3,256], index: 0, kind: input, shape index: {}, may-alias: {0,2}]
  %s1 = inlined_call_operand.vmem [shape: f32[8,1,256], index: 1, kind: input, shape index: {}]
  %s2 = inlined_call_operand.vmem [shape: f32[8,3,256], index: 2, kind: output, shape index: {}, may-alias: {0,2}]
  %s3 = sld [smem:[#allocation0]]
  $region41: #{composite_rgb_planar.1} parent=0
    _
  %s5 = ssub.s32 1, %s3
  %s6 = scalar_select 0, %s5, %s3
  loop: start=0, step=1, limit=10
  $region2: #{composite_rgb_planar.1} parent=0 // loop_pre_header
    _
  $region3: #{composite_rgb_planar.1} parent=0 // loop_header
    %s8 = sphi 0, %s12
    %p9 = scmp.ge.s32.totalorder %s8, 10
    %s15 = sphi 0, %s27
    %s16 = sphi 0, %s23
    %s17 = sphi 0, %s15
    %s18 = sphi 0, %s16
    %s19 = sphi 0, %s17
    %s20 = sphi 0, %s18
    %s32 = sphi 0, %s34
    %s35 = sphi 0, %s32
    %s36 = sphi 0, %s35
    %s52 = sphi 0, %s36
    %s60 = sphi 0, %s62
    %s63 = sphi 0, %s60
    %s64 = sphi 0, %s63
    %s80 = sphi 0, %s64
    %s88 = sphi 0, %s90
    %s91 = sphi 0, %s88
    %s92 = sphi 0, %s91
    %s108 = sphi 0, %s92
  $region4: #{composite_rgb_planar.1} parent=0 // loop_header_branch
    %11 = sbr.rel (%p9) target = $region8
  $region5: #{composite_rgb_planar.1} parent=0 // loop_body
    %s13 = ssub.s32 %s8, 1
    %s14 = ssub.s32 %s8, 2
    %s21 = sadd.s32 1, %s16
    %p22 = scmp.ge.s32.totalorder %s21, 1
    %s23 = scalar_select %p22, 0, %s21
    %s24 = sadd.s32 1, %s15
    %s25 = scalar_select %p22, %s24, %s15
    %p26 = scmp.ge.s32.totalorder %s25, 8
    %s27 = scalar_select %p26, 0, %s25
    %s28 = ssub.s32 %s15, %s27
    %s29 = ssub.s32 %s16, %s23
    %s30 = sor.u32 %s28, %s29
    %p31 = scmp.eq.s32.totalorder %s30, 0
    %s33 = sadd.s32 %s32, 1
    %s34 = scalar_select %p31, %s32, %s33
    %p37 = pneg %p31
    %p38 = scmp.eq.s32.totalorder %s8, 7
    %p39 = por %p37, %p38
    %p40 = scmp.ne.s32.totalorder %s32, %s35
    %p41 = scmp.eq.s32.totalorder %s8, 0
    %p42 = por %p40, %p41
    %p43 = scmp.ne.s32.totalorder %s32, %s35
    %p44 = scmp.eq.s32.totalorder %s13, 7
    %p45 = por %p43, %p44
    %p46 = scmp.ne.s32.totalorder %s35, %s36
    %p47 = scmp.eq.s32.totalorder %s13, 0
    %p48 = por %p46, %p47
    %p49 = scmp.ne.s32.totalorder %s35, %s36
    %p50 = scmp.eq.s32.totalorder %s14, 7
    %p51 = por %p49, %p50
    %p53 = scmp.ne.s32.totalorder %s36, %s52
    %p54 = scmp.eq.s32.totalorder %s14, 0
    %p55 = por %p53, %p54
    %s56 = ssub.s32 %s15, %s27
    %s57 = ssub.s32 %s16, %s23
    %s58 = sor.u32 %s56, %s57
    %p59 = scmp.eq.s32.totalorder %s58, 0
    %s61 = sadd.s32 %s60, 1
    %s62 = scalar_select %p59, %s60, %s61
    %p65 = pneg %p59
    %p66 = scmp.eq.s32.totalorder %s8, 7
    %p67 = por %p65, %p66
    %p68 = scmp.ne.s32.totalorder %s60, %s63
    %p69 = scmp.eq.s32.totalorder %s8, 0
    %p70 = por %p68, %p69
    %p71 = scmp.ne.s32.totalorder %s60, %s63
    %p72 = scmp.eq.s32.totalorder %s13, 7
    %p73 = por %p71, %p72
    %p74 = scmp.ne.s32.totalorder %s63, %s64
    %p75 = scmp.eq.s32.totalorder %s13, 0
    %p76 = por %p74, %p75
    %p77 = scmp.ne.s32.totalorder %s63, %s64
    %p78 = scmp.eq.s32.totalorder %s14, 7
    %p79 = por %p77, %p78
    %p81 = scmp.ne.s32.totalorder %s64, %s80
    %p82 = scmp.eq.s32.totalorder %s14, 0
    %p83 = por %p81, %p82
    %s84 = ssub.s32 %s15, %s27
    %s85 = ssub.s32 %s16, %s23
    %s86 = sor.u32 %s84, %s85
    %p87 = scmp.eq.s32.totalorder %s86, 0
    %s89 = sadd.s32 %s88, 1
    %s90 = scalar_select %p87, %s88, %s89
    %p93 = pneg %p87
    %p94 = scmp.eq.s32.totalorder %s8, 7
    %p95 = por %p93, %p94
    %p96 = scmp.ne.s32.totalorder %s88, %s91
    %p97 = scmp.eq.s32.totalorder %s8, 0
    %p98 = por %p96, %p97
    %p99 = scmp.ne.s32.totalorder %s88, %s91
    %p100 = scmp.eq.s32.totalorder %s13, 7
    %p101 = por %p99, %p100
    %p102 = scmp.ne.s32.totalorder %s91, %s92
    %p103 = scmp.eq.s32.totalorder %s13, 0
    %p104 = por %p102, %p103
    %p105 = scmp.ne.s32.totalorder %s91, %s92
    %p106 = scmp.eq.s32.totalorder %s14, 7
    %p107 = por %p105, %p106
    %p109 = scmp.ne.s32.totalorder %s92, %s108
    %p110 = scmp.eq.s32.totalorder %s14, 0
    %p111 = por %p109, %p110
    %p112 = scmp.le.s32.totalorder 1, %s8
    %p113 = scmp.lt.s32.totalorder %s8, 9
    %p114 = pnand %p112, %p113
    %p115 = pneg %p114
    // Predicated region
    $region9: #{composite_rgb_planar.1} parent=5 // pred_check
      _
    $region10: #{composite_rgb_planar.1} parent=5 // pred_check_branch
      %117 = sbr.rel (%p114) target = $region12
    $region11: #{composite_rgb_planar.1} parent=5 // pred_region
      %s118 = ssub.s32 %s8, 1
    $region12: #{composite_rgb_planar.1} parent=5 // pred_fallthru
      _
    %p119 = scmp.lt.s32.totalorder %s8, 8
    // Predicated region
    $region13: #{composite_rgb_planar.1} parent=5 // pred_check
      %p120 = pneg %p119
    $region14: #{composite_rgb_planar.1} parent=5 // pred_check_branch
      %122 = sbr.rel (%p120) target = $region16
    $region15: #{composite_rgb_planar.1} parent=5 // pred_region
      // Predicated region
      $region17: #{composite_rgb_planar.1} parent=15 // pred_check
        %p123 = pneg %p42
      $region18: #{composite_rgb_planar.1} parent=15 // pred_check_branch
        %125 = sbr.rel (%p123) target = $region20
      $region19: #{composite_rgb_planar.1} parent=15 // pred_region
        %s126 = smul.u32 2, %s16
        %p127 = scmp.lt.s32.totalorder %s15, 7
        %s128 = scalar_select %p127, %s15, 7
        %p129 = scmp.lt.s32.totalorder %s126, 1
        %s130 = scalar_select %p129, %s126, 1
        %s131 = smul.addr %s128, 2
        %s132 = sadd.s32 %s130, %s131
        %s133 = smul.addr %s132, 4
        %s134 = scalar_lea.vmem %s0, %s133
        %s135 = smul.u32 2, %s16
      $region20: #{composite_rgb_planar.1} parent=15 // pred_fallthru
        _
      // Predicated region
      $region21: #{composite_rgb_planar.1} parent=15 // pred_check
        %p136 = pneg %p70
      $region22: #{composite_rgb_planar.1} parent=15 // pred_check_branch
        %138 = sbr.rel (%p136) target = $region24
      $region23: #{composite_rgb_planar.1} parent=15 // pred_region
        %s139 = smul.u32 2, %s16
        %p140 = scmp.lt.s32.totalorder %s15, 7
        %s141 = scalar_select %p140, %s15, 7
        %p142 = scmp.lt.s32.totalorder %s139, 1
        %s143 = scalar_select %p142, %s139, 1
        %s144 = smul.addr %s141, 2
        %s145 = sadd.s32 %s143, %s144
        %s146 = scalar_lea.vmem %s1, %s145
        %s147 = smul.u32 2, %s16
      $region24: #{composite_rgb_planar.1} parent=15 // pred_fallthru
        _
    $region16: #{composite_rgb_planar.1} parent=5 // pred_fallthru
      _
    %p148 = scmp.le.s32.totalorder 1, %s8
    %p149 = scmp.lt.s32.totalorder %s8, 9
    %p150 = pnand %p148, %p149
    %p151 = pneg %p150
    // Predicated region
    $region25: #{composite_rgb_planar.1} parent=5 // pred_check
      _
    $region26: #{composite_rgb_planar.1} parent=5 // pred_check_branch
      %153 = sbr.rel (%p150) target = $region28
    $region27: #{composite_rgb_planar.1} parent=5 // pred_region
      %s154 = ssub.s32 %s8, 1
      %s155 = smul.u32 2, %s18
      %p156 = scmp.lt.s32.totalorder %s17, 7
      %s157 = scalar_select %p156, %s17, 7
      %p158 = scmp.lt.s32.totalorder %s155, 1
      %s159 = scalar_select %p158, %s155, 1
      %s160 = smul.addr %s157, 2
      %s161 = sadd.s32 %s159, %s160
      %s162 = smul.addr %s161, 4
      %s163 = scalar_lea.vmem %s0, %s162
      %p164 = pneg %p48
      %p165 = pneg %p45
      %s166 = smul.u32 2, %s18
      %p167 = scmp.lt.s32.totalorder %s17, 7
      %s168 = scalar_select %p167, %s17, 7
      %p169 = scmp.lt.s32.totalorder %s166, 1
      %s170 = scalar_select %p169, %s166, 1
      %s171 = smul.addr %s168, 2
      %s172 = sadd.s32 %s170, %s171
      %s173 = scalar_lea.vmem %s1, %s172
      %p174 = pneg %p76
      %p175 = pneg %p73
      %p176 = pneg %p104
      %p177 = pneg %p101
      %s178 = smul.u32 2, %s18
      %p179 = scmp.lt.s32.totalorder %s17, 7
      %s180 = scalar_select %p179, %s17, 7
      %p181 = scmp.lt.s32.totalorder %s178, 1
      %s182 = scalar_select %p181, %s178, 1
      %s183 = smul.addr %s180, 2
      %s184 = sadd.s32 %s182, %s183
      %s185 = smul.addr %s184, 4
      %s186 = scalar_lea.vmem %s2, %s185
      %s187 = smul.u32 2, %s18
      %p188 = scmp.lt.s32.totalorder %s17, 7
      %s189 = scalar_select %p188, %s17, 7
      %p190 = scmp.lt.s32.totalorder %s187, 1
      %s191 = scalar_select %p190, %s187, 1
      %s192 = smul.addr %s189, 2
      %s193 = sadd.s32 %s191, %s192
      %s194 = smul.addr %s193, 4
      %s195 = scalar_lea.vmem %s0, %s194
      %s196 = smul.u32 2, %s18
      %s197 = smul.u32 2, %s18
      %p198 = scmp.lt.s32.totalorder %s17, 7
      %s199 = scalar_select %p198, %s17, 7
      %p200 = scmp.lt.s32.totalorder %s197, 1
      %s201 = scalar_select %p200, %s197, 1
      %s202 = smul.addr %s199, 2
      %s203 = sadd.s32 %s201, %s202
      %s204 = scalar_lea.vmem %s1, %s203
      %s205 = smul.u32 2, %s18
      %s206 = smul.u32 2, %s18
      %p207 = scmp.lt.s32.totalorder %s17, 7
      %s208 = scalar_select %p207, %s17, 7
      %p209 = scmp.lt.s32.totalorder %s206, 1
      %s210 = scalar_select %p209, %s206, 1
      %s211 = smul.addr %s208, 2
      %s212 = sadd.s32 %s210, %s211
      %s213 = smul.addr %s212, 4
      %s214 = scalar_lea.vmem %s2, %s213
      %s215 = smul.u32 2, %s18
      %v216 = vld [vmem:[%s204] sm:$0x3]
      %v217 = vld [vmem:[%s195] sm:$0x77]
      %v219 = vlaneseq
      %v220 = vshrl.u32 %v219, 7
      %v221 = vsub.s32 0, %v220
      %v222 = vrot.slane %v216, %v221
      %v223 = vlaneseq
      %v224 = vshrl.u32 %v223, 7
      %v225 = vsub.s32 1, %v224
      %v226 = vrot.slane %v216, %v225
      %v227 = vcombine.low %v222, %v226
      %v229 = vmul.f32 %v217, %v227
      %v230 = vsub.f32 1.0, %v216
      %v232 = vlaneseq
      %v233 = vshrl.u32 %v232, 7
      %v234 = vsub.s32 0, %v233
      %v235 = vrot.slane %v230, %v234
      %v236 = vlaneseq
      %v237 = vshrl.u32 %v236, 7
      %v238 = vsub.s32 1, %v237
      %v239 = vrot.slane %v230, %v238
      %v240 = vcombine.low %v235, %v239
      %v242 = vadd.f32 %v229, %v240
      %243 = vst [vmem:[%s214] sm:$0x77] %v242
      %s244 = smul.u32 2, %s18
      %p245 = scmp.lt.s32.totalorder %s17, 7
      %s246 = scalar_select %p245, %s17, 7
      %p247 = scmp.lt.s32.totalorder %s244, 1
      %s248 = scalar_select %p247, %s244, 1
      %s249 = smul.addr %s246, 2
      %s250 = sadd.s32 %s248, %s249
      %s251 = smul.addr %s250, 4
      %s252 = scalar_lea.vmem %s2, %s251
      // Predicated region
      $region29: #{composite_rgb_planar.1} parent=27 // pred_check
        %p253 = pneg %p101
      $region30: #{composite_rgb_planar.1} parent=27 // pred_check_branch
        %255 = sbr.rel (%p253) target = $region32
      $region31: #{composite_rgb_planar.1} parent=27 // pred_region
        %s256 = smul.u32 2, %s18
      $region32: #{composite_rgb_planar.1} parent=27 // pred_fallthru
        _
    $region28: #{composite_rgb_planar.1} parent=5 // pred_fallthru
      _
    %p257 = scmp.le.s32.totalorder 2, %s8
    // Predicated region
    $region33: #{composite_rgb_planar.1} parent=5 // pred_check
      %p258 = pneg %p257
    $region34: #{composite_rgb_planar.1} parent=5 // pred_check_branch
      %260 = sbr.rel (%p258) target = $region36
    $region35: #{composite_rgb_planar.1} parent=5 // pred_region
      %s261 = ssub.s32 %s8, 2
      // Predicated region
      $region37: #{composite_rgb_planar.1} parent=35 // pred_check
        %p262 = pneg %p107
      $region38: #{composite_rgb_planar.1} parent=35 // pred_check_branch
        %264 = sbr.rel (%p262) target = $region40
      $region39: #{composite_rgb_planar.1} parent=35 // pred_region
        %s265 = smul.u32 2, %s20
        %p266 = scmp.lt.s32.totalorder %s19, 7
        %s267 = scalar_select %p266, %s19, 7
        %p268 = scmp.lt.s32.totalorder %s265, 1
        %s269 = scalar_select %p268, %s265, 1
        %s270 = smul.addr %s267, 2
        %s271 = sadd.s32 %s269, %s270
        %s272 = smul.addr %s271, 4
        %s273 = scalar_lea.vmem %s2, %s272
      $region40: #{composite_rgb_planar.1} parent=35 // pred_fallthru
        _
    $region36: #{composite_rgb_planar.1} parent=5 // pred_fallthru
      _
  $region6: #{composite_rgb_planar.1} parent=0 // loop_footer
    %s12 = sadd.s32 1, %s8
  $region7: #{composite_rgb_planar.1} parent=0 // loop_footer_branch
    %7 = sbr.rel target = $region3
  $region8: #{composite_rgb_planar.1} parent=0 // loop_exit
    _

</llo_original>
